<compile_context>
chip_gen: v7x
topology: tpu7x:2x2x1
jax: 0.10.0
libtpu: 0.0.40
codegen_flags: <defaults>
</compile_context>

<pallas_src>
import functools

import jax
import jax.numpy as jnp
from jax.experimental import pallas as pl
from jax.experimental.pallas import tpu as pltpu

LANE = 128  # TPU lane width; output features padded to a multiple of this.


def _round_up(n, m):
    return ((n + m - 1) // m) * m


def _mnist_server_kernel(x_ref, w3_ref, b3_ref, w4_ref, b4_ref, o_ref):
    # x: (TB, H), w3: (H, H), b3: (1, H), w4: (H, OP), b4: (1, OP), o: (TB, OP)
    x = x_ref[...]

    # linear3 + relu (MXU matmul, f32 accumulation; elementwise stays f32).
    h = jnp.dot(x, w3_ref[...], preferred_element_type=jnp.float32)
    h = jnp.maximum(h + b3_ref[...].astype(jnp.float32), 0.0)

    # linear4 + sigmoid. Padded output columns have zero weights/bias
    # (-> sigmoid(0)=0.5) and are sliced away outside the kernel.
    y = jnp.dot(h.astype(w4_ref.dtype), w4_ref[...],
                preferred_element_type=jnp.float32)
    y = y + b4_ref[...].astype(jnp.float32)
    # Exact sigmoid; the exp runs on the otherwise-idle EUP slot.
    o_ref[...] = jax.nn.sigmoid(y).astype(o_ref.dtype)


def prepare_mnist_server_params(w3, b3, w4, b4, dtype=jnp.float32):
    """One-time parameter prep (do at model-load time, NOT per call).

    - Transposes PyTorch nn.Linear (out_features, in_features) weights to
      (in, out) so the kernel computes x @ W directly on the MXU.
    - Pads the output feature dim O up to a multiple of 128 with zeros so the
      kernel's stores are lane-dense (no masked partial stores).
    - Pass dtype=jnp.bfloat16 for the throughput path: streamed x/output
      bytes are halved; accumulation stays f32 via preferred_element_type.
    """
    w3 = jnp.asarray(w3, dtype)
    b3 = jnp.asarray(b3, dtype)
    w4 = jnp.asarray(w4, dtype)
    b4 = jnp.asarray(b4, dtype)

    H = w3.shape[0]
    O = w4.shape[0]
    OP = _round_up(O, LANE)  # 10 -> 128

    w3_t = w3.T.astype(dtype)                                  # (H, H)
    b3_p = b3.reshape(1, H)                                    # (1, H)
    w4_t = jnp.zeros((H, OP), dtype).at[:, :O].set(w4.T)       # (H, OP)
    b4_p = jnp.zeros((1, OP), dtype).at[:, :O].set(b4)         # (1, OP)
    return (w3_t, b3_p, w4_t, b4_p), O


@functools.partial(jax.jit, static_argnames=("out_features", "block_b"))
def mnist_server_forward(x, params, *, out_features, block_b=4096):
    """x: (B, H). params: output of prepare_mnist_server_params.

    Tiles only the batch dim; weights stay resident in VMEM across grid steps.
    Grid handles a ragged final block (no full-array padding of x).
    """
    w3_t, b3_p, w4_t, b4_p = params
    B, H = x.shape
    OP = w4_t.shape[1]
    dtype = w3_t.dtype
    itemsize = jnp.dtype(dtype).itemsize

    # Batch tile: multiple of 8 sublanes, capped at block_b. Target >=2 grid
    # steps once B exceeds a single tile so v7x's two TensorCores both work;
    # tiny B collapses to one tile.
    block_b = max(8, (block_b // 8) * 8)
    tb = max(8, min(block_b, _round_up(pl.cdiv(B, 2), 8)))
    grid = (pl.cdiv(B, tb),)

    x_p = x.astype(dtype)

    cost = pl.CostEstimate(
        flops=2 * B * H * (H + OP),
        transcendentals=B * OP,
        bytes_accessed=(B * (H + OP) + H * H + H + H * OP + OP) * itemsize,
    )

    out = pl.pallas_call(
        _mnist_server_kernel,
        out_shape=jax.ShapeDtypeStruct((B, OP), dtype),
        grid=grid,
        in_specs=[
            pl.BlockSpec((tb, H), lambda i: (i, 0)),    # activations stream
            pl.BlockSpec((H, H), lambda i: (0, 0)),     # weights resident
            pl.BlockSpec((1, H), lambda i: (0, 0)),
            pl.BlockSpec((H, OP), lambda i: (0, 0)),
            pl.BlockSpec((1, OP), lambda i: (0, 0)),
        ],
        out_specs=pl.BlockSpec((tb, OP), lambda i: (i, 0)),
        compiler_params=pltpu.CompilerParams(
            dimension_semantics=("parallel",)),          # lets v7x use both TCs
        cost_estimate=cost,
    )(x_p, w3_t, b3_p, w4_t, b4_p)

    # Padded columns (sigmoid(0)=0.5) are dropped here; downstream must not
    # consume columns >= out_features if this slice is ever removed.
    return out[:, :out_features]


def _reference(x, w3, b3, w4, b4):
    h = jnp.maximum(x @ w3.T + b3, 0.0)
    return jax.nn.sigmoid(h @ w4.T + b4)


if __name__ == "__main__":
    # Small shapes consistent with the module: hidden=32, out=10, batch=8.
    B, HIDDEN, OUT = 8, 32, 10

    key = jax.random.PRNGKey(0)
    kx, k3w, k3b, k4w, k4b = jax.random.split(key, 5)

    x = jax.random.normal(kx, (B, HIDDEN), dtype=jnp.float32)

    # PyTorch nn.Linear convention: weight (out_features, in_features).
    bound3 = 1.0 / (HIDDEN ** 0.5)
    w3 = jax.random.uniform(k3w, (HIDDEN, HIDDEN), jnp.float32, -bound3, bound3)
    b3 = jax.random.uniform(k3b, (HIDDEN,), jnp.float32, -bound3, bound3)
    bound4 = 1.0 / (HIDDEN ** 0.5)
    w4 = jax.random.uniform(k4w, (OUT, HIDDEN), jnp.float32, -bound4, bound4)
    b4 = jax.random.uniform(k4b, (OUT,), jnp.float32, -bound4, bound4)

    # One-time parameter prep (transposes + lane-dense output padding).
    params, out_features = prepare_mnist_server_params(w3, b3, w4, b4)

    # Main check: B=8, single tile, f32.
    out = mnist_server_forward(x, params, out_features=out_features)
    out = jax.block_until_ready(out)
    ref = _reference(x, w3, b3, w4, b4)
    assert out.shape == (B, OUT), out.shape
    assert jnp.allclose(out, ref, atol=1e-5, rtol=1e-5), "mismatch vs reference"

    # Secondary check: multi-step grid with a ragged last block (B=20, tb=8,
    # grid=3, last block has 4 valid rows) — exercises the no-pad path.
    x2 = jax.random.normal(jax.random.PRNGKey(1), (20, HIDDEN), jnp.float32)
    out2 = mnist_server_forward(x2, params, out_features=out_features,
                                block_b=8)
    out2 = jax.block_until_ready(out2)
    ref2 = _reference(x2, w3, b3, w4, b4)
    assert out2.shape == (20, OUT), out2.shape
    assert jnp.allclose(out2, ref2, atol=1e-5, rtol=1e-5), "mismatch (tiled)"

    # Throughput-mode check: bf16 streamed tensors / bf16 output, looser tol.
    params_bf16, _ = prepare_mnist_server_params(w3, b3, w4, b4,
                                                 dtype=jnp.bfloat16)
    out3 = mnist_server_forward(x, params_bf16, out_features=out_features)
    out3 = jax.block_until_ready(out3)
    assert out3.dtype == jnp.bfloat16, out3.dtype
    assert out3.shape == (B, OUT), out3.shape
    assert jnp.allclose(out3.astype(jnp.float32), ref, atol=5e-2), \
        "mismatch vs reference (bf16)"

    print("KERNEL_OK")
</pallas_src>

<mosaic_0001>
module attributes {stable_mosaic.version = 11 : i64} {
  func.func @_mnist_server_kernel(%arg0: i32, %arg1: memref<8x32xf32, #tpu.memory_space<vmem>>, %arg2: memref<32x32xf32, #tpu.memory_space<vmem>>, %arg3: memref<1x32xf32, #tpu.memory_space<vmem>>, %arg4: memref<32x128xf32, #tpu.memory_space<vmem>>, %arg5: memref<1x128xf32, #tpu.memory_space<vmem>>, %arg6: memref<8x128xf32, #tpu.memory_space<vmem>>) attributes {dimension_semantics = [#tpu.dimension_semantics<parallel>], iteration_bounds = array<i64: 1>, scalar_prefetch = 0 : i64, scratch_operands = 0 : i64, tpu.core_type = #tpu.core_type<tc>, window_params = [{transform_indices = @transform_0, window_bounds = array<i64: 8, 32>}, {pipeline_mode = #tpu.pipeline_mode<synchronous>, transform_indices = @transform_1, window_bounds = array<i64: 32, 32>}, {pipeline_mode = #tpu.pipeline_mode<synchronous>, transform_indices = @transform_2, window_bounds = array<i64: 1, 32>}, {pipeline_mode = #tpu.pipeline_mode<synchronous>, transform_indices = @transform_3, window_bounds = array<i64: 32, 128>}, {pipeline_mode = #tpu.pipeline_mode<synchronous>, transform_indices = @transform_4, window_bounds = array<i64: 1, 128>}, {transform_indices = @transform_5, window_bounds = array<i64: 8, 128>}]} {
    %c0 = arith.constant 0 : index
    %c0_0 = arith.constant 0 : index
    %0 = vector.load %arg1[%c0, %c0_0] : memref<8x32xf32, #tpu.memory_space<vmem>>, vector<8x32xf32>
    %c0_1 = arith.constant 0 : index
    %c0_2 = arith.constant 0 : index
    %1 = vector.load %arg2[%c0_1, %c0_2] : memref<32x32xf32, #tpu.memory_space<vmem>>, vector<32x32xf32>
    %cst = arith.constant dense<0.000000e+00> : vector<8x32xf32>
    %2 = tpu.matmul %0, %1, %cst {dimension_numbers = #tpu.dot_dimension_numbers<[1], [0], [0], [1], [0, 0, 1, 1], [], []>} : vector<8x32xf32>, vector<32x32xf32>, vector<8x32xf32> -> vector<8x32xf32>
    %c0_3 = arith.constant 0 : index
    %c0_4 = arith.constant 0 : index
    %3 = vector.load %arg3[%c0_3, %c0_4] : memref<1x32xf32, #tpu.memory_space<vmem>>, vector<1x32xf32>
    %4 = vector.broadcast %3 : vector<1x32xf32> to vector<8x32xf32>
    %5 = arith.addf %2, %4 : vector<8x32xf32>
    %cst_5 = arith.constant 0.000000e+00 : f32
    %6 = vector.broadcast %cst_5 : f32 to vector<8x32xf32>
    %7 = arith.maximumf %5, %6 : vector<8x32xf32>
    %c0_6 = arith.constant 0 : index
    %c0_7 = arith.constant 0 : index
    %8 = vector.load %arg4[%c0_6, %c0_7] : memref<32x128xf32, #tpu.memory_space<vmem>>, vector<32x128xf32>
    %cst_8 = arith.constant dense<0.000000e+00> : vector<8x128xf32>
    %9 = tpu.matmul %7, %8, %cst_8 {dimension_numbers = #tpu.dot_dimension_numbers<[1], [0], [0], [1], [0, 0, 1, 1], [], []>} : vector<8x32xf32>, vector<32x128xf32>, vector<8x128xf32> -> vector<8x128xf32>
    %c0_9 = arith.constant 0 : index
    %c0_10 = arith.constant 0 : index
    %10 = vector.load %arg5[%c0_9, %c0_10] : memref<1x128xf32, #tpu.memory_space<vmem>>, vector<1x128xf32>
    %11 = vector.broadcast %10 : vector<1x128xf32> to vector<8x128xf32>
    %12 = arith.addf %9, %11 : vector<8x128xf32>
    %13 = arith.negf %12 : vector<8x128xf32>
    %14 = math.exp %13 : vector<8x128xf32>
    %cst_11 = arith.constant 1.000000e+00 : f32
    %15 = vector.broadcast %cst_11 : f32 to vector<8x128xf32>
    %16 = arith.addf %15, %14 : vector<8x128xf32>
    %17 = arith.divf %15, %16 : vector<8x128xf32>
    %c0_12 = arith.constant 0 : index
    %c0_13 = arith.constant 0 : index
    %18 = vector.load %arg6[%c0_12, %c0_13] : memref<8x128xf32, #tpu.memory_space<vmem>>, vector<8x128xf32>
    tpu.vector_store %arg6[%c0_12, %c0_13], %17 {strides = array<i32>} : memref<8x128xf32, #tpu.memory_space<vmem>>, vector<8x128xf32>,
    return
  }
  func.func @transform_0(%arg0: i32) -> (i32, i32) {
    %c0_i32 = arith.constant 0 : i32
    %c0_i32_0 = arith.constant 0 : i32
    return %arg0, %c0_i32 : i32, i32
  }
  func.func @transform_1(%arg0: i32) -> (i32, i32) {
    %c0_i32 = arith.constant 0 : i32
    %c0_i32_0 = arith.constant 0 : i32
    %c0_i32_1 = arith.constant 0 : i32
    return %c0_i32, %c0_i32_0 : i32, i32
  }
  func.func @transform_2(%arg0: i32) -> (i32, i32) {
    %c0_i32 = arith.constant 0 : i32
    %c0_i32_0 = arith.constant 0 : i32
    %c0_i32_1 = arith.constant 0 : i32
    return %c0_i32, %c0_i32_0 : i32, i32
  }
  func.func @transform_3(%arg0: i32) -> (i32, i32) {
    %c0_i32 = arith.constant 0 : i32
    %c0_i32_0 = arith.constant 0 : i32
    %c0_i32_1 = arith.constant 0 : i32
    return %c0_i32, %c0_i32_0 : i32, i32
  }
  func.func @transform_4(%arg0: i32) -> (i32, i32) {
    %c0_i32 = arith.constant 0 : i32
    %c0_i32_0 = arith.constant 0 : i32
    %c0_i32_1 = arith.constant 0 : i32
    return %c0_i32, %c0_i32_0 : i32, i32
  }
  func.func @transform_5(%arg0: i32) -> (i32, i32) {
    %c0_i32 = arith.constant 0 : i32
    %c0_i32_0 = arith.constant 0 : i32
    return %arg0, %c0_i32 : i32, i32
  }
}

</mosaic_0001>

<llo_original>
// kernel: mnist_server_forward.1
$region0: #{mnist_server_forward.1}
  #allocation0 [shape = 'u32[]', space=smem, size = 0x4, offset = 0x4, fixed_abs, tag = 'smem constant byte address 0x4 - core index']
  #allocation1 [shape = 'u32[144,128]{1,0:T(1,128)}', space=vmem, size = 0x12000, scoped, tag = 'internal scratch']
  %s0 = inlined_call_operand.hbm [shape: f32[8,32], index: 0, kind: input, shape index: {}]
  %s1 = inlined_call_operand.hbm [shape: f32[32,32], index: 1, kind: input, shape index: {}]
  %s2 = inlined_call_operand.vmem [shape: f32[1,32], index: 2, kind: input, shape index: {}]
  %s3 = inlined_call_operand.hbm [shape: f32[32,128], index: 3, kind: input, shape index: {}]
  %s4 = inlined_call_operand.vmem [shape: f32[1,128], index: 4, kind: input, shape index: {}]
  %s5 = inlined_call_operand.hbm [shape: f32[8,128], index: 5, kind: output, shape index: {}]
  %s6 = sld [smem:[#allocation0]]
  $region42: #{mnist_server_forward.1} parent=0
    _
  %s8 = ssub.s32 1, %s6
  %s9 = scalar_select 0, %s8, %s6
  $region1: #{mnist_server_forward.1} parent=0
    #allocation2 [shape = 'u8[4096]{0}', space=vmem, size = 0x1000, scoped, tag = 'input window, operand 0, single buffered']
    #allocation3 [shape = 's32[1]{0}', space=sflag, size = 0x4, scoped, tag = 'scoped memory for mnist_server_forward.1']
    #allocation4 [shape = 's32[1]{0}', space=sflag, size = 0x4, scoped, tag = 'scoped memory for mnist_server_forward.1']
    #allocation5 [shape = 'u8[16384]{0}', space=vmem, size = 0x4000, scoped, tag = 'input window, operand 1, single buffered']
    #allocation6 [shape = 's32[1]{0}', space=sflag, size = 0x4, scoped, tag = 'scoped memory for mnist_server_forward.1']
    #allocation7 [shape = 'u8[16384]{0}', space=vmem, size = 0x4000, scoped, tag = 'input window, operand 3, single buffered']
    #allocation8 [shape = 'u8[4096]{0}', space=vmem, size = 0x1000, scoped, tag = 'output window, operand 0, single buffered']
    %10 = vsyncpa [#allocation3], 0
    %11 = vsyncpa [#allocation6], 0
    %12 = vsyncpa [#allocation4], 0
    // Predicated region
    $region2: #{mnist_server_forward.1} parent=1 // pred_check
      _
    $region3: #{mnist_server_forward.1} parent=1 // pred_check_branch
      %14 = sbr.rel (0) target = $region5
    $region4: #{mnist_server_forward.1} parent=1 // pred_region
      %s16 = ssub.s32 128, 128
      %17 = vsyncadd [#allocation3], %s16
      %s19 = sshll.u32 [#allocation2], 4
      %s20 = int_to_ptr.vmem [resolvable:$true] %s19
      %22 = dma.hbm_to_vmem [thread:$0]  %s0, 128, %s20, [#allocation3]
    $region5: #{mnist_server_forward.1} parent=1 // pred_fallthru
      _
    // Predicated region
    $region6: #{mnist_server_forward.1} parent=1 // pred_check
      _
    $region7: #{mnist_server_forward.1} parent=1 // pred_check_branch
      %24 = sbr.rel (0) target = $region9
    $region8: #{mnist_server_forward.1} parent=1 // pred_region
      %s26 = ssub.s32 512, 512
      %27 = vsyncadd [#allocation6], %s26
      %s28 = sshll.u32 [#allocation5], 4
      %s29 = int_to_ptr.vmem [resolvable:$true] %s28
      %34 = dma.hbm_to_vmem [thread:$0]  %s1, 512, %s29, [#allocation6], 128, 128, 8
    $region9: #{mnist_server_forward.1} parent=1 // pred_fallthru
      _
    // Predicated region
    $region10: #{mnist_server_forward.1} parent=1 // pred_check
      _
    $region11: #{mnist_server_forward.1} parent=1 // pred_check_branch
      %36 = sbr.rel (0) target = $region13
    $region12: #{mnist_server_forward.1} parent=1 // pred_region
      _
    $region13: #{mnist_server_forward.1} parent=1 // pred_fallthru
      _
    // Predicated region
    $region14: #{mnist_server_forward.1} parent=1 // pred_check
      _
    $region15: #{mnist_server_forward.1} parent=1 // pred_check_branch
      %38 = sbr.rel (0) target = $region17
    $region16: #{mnist_server_forward.1} parent=1 // pred_region
      %s40 = ssub.s32 512, 512
      %41 = vsyncadd [#allocation6], %s40
      %s42 = sshll.u32 [#allocation7], 4
      %s43 = int_to_ptr.vmem [resolvable:$true] %s42
      %48 = dma.hbm_to_vmem [thread:$0]  %s3, 512, %s43, [#allocation6], 128, 128, 8
    $region17: #{mnist_server_forward.1} parent=1 // pred_fallthru
      _
    // Predicated region
    $region18: #{mnist_server_forward.1} parent=1 // pred_check
      _
    $region19: #{mnist_server_forward.1} parent=1 // pred_check_branch
      %50 = sbr.rel (0) target = $region21
    $region20: #{mnist_server_forward.1} parent=1 // pred_region
      _
    $region21: #{mnist_server_forward.1} parent=1 // pred_fallthru
      _
    // Predicated region
    $region22: #{mnist_server_forward.1} parent=1 // pred_check
      _
    $region23: #{mnist_server_forward.1} parent=1 // pred_check_branch
      %52 = sbr.rel (0) target = $region25
    $region24: #{mnist_server_forward.1} parent=1 // pred_region
      %53 = dma.done [#allocation3], 128
    $region25: #{mnist_server_forward.1} parent=1 // pred_fallthru
      _
    // Predicated region
    $region26: #{mnist_server_forward.1} parent=1 // pred_check
      _
    $region27: #{mnist_server_forward.1} parent=1 // pred_check_branch
      %55 = sbr.rel (0) target = $region29
    $region28: #{mnist_server_forward.1} parent=1 // pred_region
      %56 = dma.done [#allocation6], 512
    $region29: #{mnist_server_forward.1} parent=1 // pred_fallthru
      _
    // Predicated region
    $region30: #{mnist_server_forward.1} parent=1 // pred_check
      _
    $region31: #{mnist_server_forward.1} parent=1 // pred_check_branch
      %58 = sbr.rel (0) target = $region33
    $region32: #{mnist_server_forward.1} parent=1 // pred_region
      %59 = dma.done [#allocation6], 512
    $region33: #{mnist_server_forward.1} parent=1 // pred_fallthru
      _
    %v60 = vld [vmem:[#allocation2] sm:$0xff]
    %v61 = vld [vmem:[#allocation5] sm:$0xff]
    %v62 = vld [vmem:[#allocation5 + $0x8] sm:$0xff]
    %v63 = vld [vmem:[#allocation5 + $0x10] sm:$0xff]
    %v64 = vld [vmem:[#allocation5 + $0x18] sm:$0xff]
    %v65 = vld [vmem:[%s2] sm:$0x1]
    %v67 = vlaneseq
    %v68 = vshrl.u32 %v67, 7
    %v69 = vsub.s32 0, %v68
    %v70 = vrot.slane %v65, %v69
    %vm72 = vcmask 261120
    %v74 = vsel %vm72, %v60, 0
    %76 = vmatprep.subr.mxu0 0.0
    %77 = vmatpush1.msra.mxu0 %v61
    %78 = vmatprep.subr.mxu0 0.0
    %79 = vmatpush1.msra.mxu0 %v62
    %80 = vmatprep.subr.mxu0 0.0
    %81 = vmatpush1.msra.mxu0 %v63
    %82 = vmatprep.subr.mxu0 0.0
    %83 = vmatpush1.msra.mxu0 %v64
    %84 = vmatprep.subr.mxu0 0.0
    %85 = vmatpush1.msra.mxu0 0.0
    %86 = vmatprep.subr.mxu0 0.0
    %87 = vmatpush1.msra.mxu0 0.0
    %88 = vmatprep.subr.mxu0 0.0
    %89 = vmatpush1.msra.mxu0 0.0
    %90 = vmatprep.subr.mxu0 0.0
    %91 = vmatpush1.msra.mxu0 0.0
    %92 = vmatprep.subr.mxu0 0.0
    %93 = vmatpush1.msra.mxu0 0.0
    %94 = vmatprep.subr.mxu0 0.0
    %95 = vmatpush1.msra.mxu0 0.0
    %96 = vmatprep.subr.mxu0 0.0
    %97 = vmatpush1.msra.mxu0 0.0
    %98 = vmatprep.subr.mxu0 0.0
    %99 = vmatpush1.msra.mxu0 0.0
    %100 = vmatprep.subr.mxu0 0.0
    %101 = vmatpush1.msra.mxu0 0.0
    %102 = vmatprep.subr.mxu0 0.0
    %103 = vmatpush1.msra.mxu0 0.0
    %104 = vmatprep.subr.mxu0 0.0
    %105 = vmatpush1.msra.mxu0 0.0
    %106 = vmatprep.subr.mxu0 0.0
    %107 = vmatpush1.msra.mxu0 0.0
    %108 = vmatprep.subr.mxu0 0.0
    %109 = vmatpush1.msra.mxu0 0.0
    %110 = vmatprep.subr.mxu0 0.0
    %111 = vmatpush1.msra.mxu0 0.0
    %112 = vmatprep.subr.mxu0 0.0
    %113 = vmatpush1.msra.mxu0 0.0
    %114 = vmatprep.subr.mxu0 0.0
    %115 = vmatpush1.msra.mxu0 0.0
    %116 = vmatprep.subr.mxu0 0.0
    %117 = vmatpush1.msra.mxu0 0.0
    %118 = vmatprep.subr.mxu0 0.0
    %119 = vmatpush1.msra.mxu0 0.0
    %120 = vmatprep.subr.mxu0 0.0
    %121 = vmatpush1.msra.mxu0 0.0
    %122 = vmatprep.subr.mxu0 0.0
    %123 = vmatpush1.msra.mxu0 0.0
    %124 = vmatprep.subr.mxu0 0.0
    %125 = vmatpush1.msra.mxu0 0.0
    %126 = vmatprep.subr.mxu0 0.0
    %127 = vmatpush1.msra.mxu0 0.0
    %128 = vmatprep.subr.mxu0 0.0
    %129 = vmatpush1.msra.mxu0 0.0
    %130 = vmatprep.subr.mxu0 0.0
    %131 = vmatpush1.msra.mxu0 0.0
    %132 = vmatprep.subr.mxu0 0.0
    %133 = vmatpush1.msra.mxu0 0.0
    %134 = vmatprep.subr.mxu0 0.0
    %135 = vmatpush1.msra.mxu0 0.0
    %136 = vmatprep.subr.mxu0 0.0
    %137 = vmatpush1.msra.mxu0 0.0
    %138 = vmatprep.subr.mxu0 0.0
    %139 = vmatpush1.msra.mxu0 0.0
    %140 = vmatprep.mubr.f32.mxu0 0.0
    %141 = vmatmul.mubr.f32.gmra.mrb[0].mxu0 %v74
    %v142 = vpop.f32.mrb[0].mxu0
    %v143 = vadd.f32 %v70, %v142
    %v144 = vpop.f32.mrb[0].mxu0
    %145 = vdwg.mxu0
    %v146 = vmax.f32 %v143, 0.0
    %v147 = vld [vmem:[#allocation7] sm:$0xff]
    %v148 = vld [vmem:[#allocation7 + $0x8] sm:$0xff]
    %v149 = vld [vmem:[#allocation7 + $0x10] sm:$0xff]
    %v150 = vld [vmem:[#allocation7 + $0x18] sm:$0xff]
    %v151 = vld [vmem:[%s4] sm:$0x1]
    %v153 = vlaneseq
    %v154 = vshrl.u32 %v153, 7
    %v155 = vsub.s32 0, %v154
    %v156 = vrot.slane %v151, %v155
    %v159 = vsel %vm72, %v146, 0
    %161 = vmatprep.subr.mxu0 0.0
    %162 = vmatpush1.msra.mxu0 %v147
    %163 = vmatprep.subr.mxu0 0.0
    %164 = vmatpush1.msra.mxu0 %v148
    %165 = vmatprep.subr.mxu0 0.0
    %166 = vmatpush1.msra.mxu0 %v149
    %167 = vmatprep.subr.mxu0 0.0
    %168 = vmatpush1.msra.mxu0 %v150
    %169 = vmatprep.subr.mxu0 0.0
    %170 = vmatpush1.msra.mxu0 0.0
    %171 = vmatprep.subr.mxu0 0.0
    %172 = vmatpush1.msra.mxu0 0.0
    %173 = vmatprep.subr.mxu0 0.0
    %174 = vmatpush1.msra.mxu0 0.0
    %175 = vmatprep.subr.mxu0 0.0
    %176 = vmatpush1.msra.mxu0 0.0
    %177 = vmatprep.subr.mxu0 0.0
    %178 = vmatpush1.msra.mxu0 0.0
    %179 = vmatprep.subr.mxu0 0.0
    %180 = vmatpush1.msra.mxu0 0.0
    %181 = vmatprep.subr.mxu0 0.0
    %182 = vmatpush1.msra.mxu0 0.0
    %183 = vmatprep.subr.mxu0 0.0
    %184 = vmatpush1.msra.mxu0 0.0
    %185 = vmatprep.subr.mxu0 0.0
    %186 = vmatpush1.msra.mxu0 0.0
    %187 = vmatprep.subr.mxu0 0.0
    %188 = vmatpush1.msra.mxu0 0.0
    %189 = vmatprep.subr.mxu0 0.0
    %190 = vmatpush1.msra.mxu0 0.0
    %191 = vmatprep.subr.mxu0 0.0
    %192 = vmatpush1.msra.mxu0 0.0
    %193 = vmatprep.subr.mxu0 0.0
    %194 = vmatpush1.msra.mxu0 0.0
    %195 = vmatprep.subr.mxu0 0.0
    %196 = vmatpush1.msra.mxu0 0.0
    %197 = vmatprep.subr.mxu0 0.0
    %198 = vmatpush1.msra.mxu0 0.0
    %199 = vmatprep.subr.mxu0 0.0
    %200 = vmatpush1.msra.mxu0 0.0
    %201 = vmatprep.subr.mxu0 0.0
    %202 = vmatpush1.msra.mxu0 0.0
    %203 = vmatprep.subr.mxu0 0.0
    %204 = vmatpush1.msra.mxu0 0.0
    %205 = vmatprep.subr.mxu0 0.0
    %206 = vmatpush1.msra.mxu0 0.0
    %207 = vmatprep.subr.mxu0 0.0
    %208 = vmatpush1.msra.mxu0 0.0
    %209 = vmatprep.subr.mxu0 0.0
    %210 = vmatpush1.msra.mxu0 0.0
    %211 = vmatprep.subr.mxu0 0.0
    %212 = vmatpush1.msra.mxu0 0.0
    %213 = vmatprep.subr.mxu0 0.0
    %214 = vmatpush1.msra.mxu0 0.0
    %215 = vmatprep.subr.mxu0 0.0
    %216 = vmatpush1.msra.mxu0 0.0
    %217 = vmatprep.subr.mxu0 0.0
    %218 = vmatpush1.msra.mxu0 0.0
    %219 = vmatprep.subr.mxu0 0.0
    %220 = vmatpush1.msra.mxu0 0.0
    %221 = vmatprep.subr.mxu0 0.0
    %222 = vmatpush1.msra.mxu0 0.0
    %223 = vmatprep.subr.mxu0 0.0
    %224 = vmatpush1.msra.mxu0 0.0
    %225 = vmatprep.mubr.f32.mxu0 0.0
    %226 = vmatmul.mubr.f32.gmra.mrb[0].mxu0 %v159
    %v227 = vpop.f32.mrb[0].mxu0
    %v228 = vadd.f32 %v156, %v227
    %v229 = vpop.f32.mrb[0].mxu0
    %230 = vdwg.mxu0
    %v231 = vxor.u32 %v228, 2147483648
    %v232 = vmul.f32 %v231, 1.442695
    %v233 = vpow.pop %v232
    %v234 = vadd.f32 %v233, 1.0
    %v235 = vrcp.pop %v234
    %v236 = vmul.f32 1.0, %v235
    %237 = vst [vmem:[#allocation8] sm:$0xff] %v236
    // Predicated region
    $region34: #{mnist_server_forward.1} parent=1 // pred_check
      _
    $region35: #{mnist_server_forward.1} parent=1 // pred_check_branch
      %239 = sbr.rel (0) target = $region37
    $region36: #{mnist_server_forward.1} parent=1 // pred_region
      %s241 = ssub.s32 128, 128
      %242 = vsyncadd [#allocation4], %s241
      %s244 = sshll.u32 [#allocation8], 4
      %s245 = int_to_ptr.vmem [resolvable:$true] %s244
      %247 = dma.vmem_to_hbm [thread:$0]  %s245, 128, %s5, [#allocation4]
    $region37: #{mnist_server_forward.1} parent=1 // pred_fallthru
      _
    // Predicated region
    $region38: #{mnist_server_forward.1} parent=1 // pred_check
      _
    $region39: #{mnist_server_forward.1} parent=1 // pred_check_branch
      %249 = sbr.rel (0) target = $region41
    $region40: #{mnist_server_forward.1} parent=1 // pred_region
      %250 = dma.done [#allocation4], 128
    $region41: #{mnist_server_forward.1} parent=1 // pred_fallthru
      _
    %251 = vsyncpa [#allocation3], 1
    %252 = vsyncpa [#allocation6], 1
    %253 = vsyncpa [#allocation4], 1

</llo_original>
